<compile_context>
chip_gen: v5e
topology: v5e:2x2
jax: 0.10.0
libtpu: 0.0.40
codegen_flags: <defaults>
</compile_context>

<pallas_src>
import jax
import jax.numpy as jnp
from jax.experimental import pallas as pl
from jax.experimental.pallas import tpu as pltpu

# Below this element count the fused plain-JAX path wins (launch cost + fusion
# barrier of a custom call outweigh any kernel-side gain for a streaming op).
_SMALL_FALLBACK_ELEMS = 1 << 20
# Target bytes per input block (~4 MiB): 3 operands x 2 buffers x 4 MiB = 24 MiB
# VMEM, safe on v5e/v6e (128 MiB) and v7x (64 MiB), under the 32 MiB limit below.
_TARGET_BLOCK_BYTES = 4 << 20
_VMEM_LIMIT_BYTES = 32 * 1024 * 1024


def _my_add_kernel(a_ref, b_ref, o_ref):
    # Pure VPU elementwise hot path, dtype-preserving: out = a + a + b (== 2a + b).
    a = a_ref[...]
    o_ref[...] = a + a + b_ref[...]


def _pick_lanes(n: int):
    """Widest lane-dense last dim (multiple of 128) that divides n, else None."""
    for lanes in (1024, 512, 256, 128):
        if n % lanes == 0:
            return lanes
    return None


def _choose_rows_per_block(rows: int, lanes: int, itemsize: int) -> int:
    """Pick the sublane tile (multiple of 8) targeting ~4 MiB blocks and a
    balanced, even-count grid (>=2 steps) so v7x's two TCs both get work."""
    if rows < 16:
        # Too small to split into two multiple-of-8 blocks: one full-extent block
        # (full array extent is allowed even when not a multiple of 8).
        return rows
    tr_cap = max(8, (_TARGET_BLOCK_BYTES // (lanes * itemsize)) // 8 * 8)
    steps = -(-rows // tr_cap)          # cdiv
    steps = max(steps, 2)               # >= 2 steps for dual-TC sharding on v7x
    if steps % 2:
        steps += 1                      # even count -> balanced across 2 cores
    tr = -(-rows // steps)              # balanced rows per block
    tr = -(-tr // 8) * 8                # round up to multiple of 8
    return tr


def _my_add_2d(a2: jax.Array, b2: jax.Array) -> jax.Array:
    rows, lanes = a2.shape
    itemsize = jnp.dtype(a2.dtype).itemsize
    tr = _choose_rows_per_block(rows, lanes, itemsize)
    grid = (pl.cdiv(rows, tr),)  # partial last block (if any) is masked by Pallas

    n = rows * lanes
    cost = pl.CostEstimate(
        flops=2 * n,                       # one add-to-self + one add per element
        transcendentals=0,
        bytes_accessed=3 * n * itemsize,   # read a, read b, write out
    )

    return pl.pallas_call(
        _my_add_kernel,
        out_shape=jax.ShapeDtypeStruct((rows, lanes), a2.dtype),
        grid_spec=pltpu.PrefetchScalarGridSpec(
            num_scalar_prefetch=0,
            grid=grid,
            in_specs=[
                pl.BlockSpec((tr, lanes), lambda i: (i, 0)),
                pl.BlockSpec((tr, lanes), lambda i: (i, 0)),
            ],
            out_specs=pl.BlockSpec((tr, lanes), lambda i: (i, 0)),
        ),
        compiler_params=pltpu.CompilerParams(
            dimension_semantics=("parallel",),   # shard the row-grid across v7x's 2 TCs
            vmem_limit_bytes=_VMEM_LIMIT_BYTES,  # explicit; >= 24 MiB actually used
        ),
        cost_estimate=cost,
    )(a2, b2)


def my_add(a: jax.Array, b: jax.Array, *, force_pallas: bool = False) -> jax.Array:
    assert a.shape == b.shape and a.dtype == b.dtype
    n = a.size
    lanes = _pick_lanes(n)

    if n == 0 or lanes is None or (n < _SMALL_FALLBACK_ELEMS and not force_pallas):
        # Ragged (n % 128 != 0) or small sizes: fused plain-JAX path; XLA's fused
        # a+a+b already sits at the HBM roofline and can fuse into neighbors.
        return a + a + b

    # Free (bitcast-level) reshape into a lane-dense 2-D slab; no padding copies.
    a2 = a.reshape(n // lanes, lanes)
    b2 = b.reshape(n // lanes, lanes)
    out2 = _my_add_2d(a2, b2)
    return out2.reshape(a.shape)


if __name__ == "__main__":
    key = jax.random.PRNGKey(0)
    ka, kb, kc, kd = jax.random.split(key, 4)

    # 1) Small NCHW inputs consistent with the module; force the Pallas path
    #    so the kernel itself is exercised and verified.
    a = jax.random.normal(ka, (2, 4, 16, 16), dtype=jnp.float32)
    b = jax.random.normal(kb, (2, 4, 16, 16), dtype=jnp.float32)
    out = jax.block_until_ready(my_add(a, b, force_pallas=True))
    ref = 2.0 * a + b
    assert out.shape == ref.shape and out.dtype == ref.dtype
    assert jnp.allclose(out, ref, atol=1e-6, rtol=1e-6)

    # 2) Larger shape: multi-step (>=2, balanced) grid with a masked last block.
    a2 = jax.random.normal(kc, (3, 4, 160, 160), dtype=jnp.float32)
    b2 = jax.random.normal(kd, (3, 4, 160, 160), dtype=jnp.float32)
    out2 = jax.block_until_ready(my_add(a2, b2, force_pallas=True))
    assert jnp.allclose(out2, 2.0 * a2 + b2, atol=1e-6, rtol=1e-6)

    # 3) Integer dtype: dtype-preserving path (a + a + b), forced through Pallas.
    ai = jax.random.randint(ka, (2, 4, 16, 16), -100, 100, dtype=jnp.int32)
    bi = jax.random.randint(kb, (2, 4, 16, 16), -100, 100, dtype=jnp.int32)
    outi = jax.block_until_ready(my_add(ai, bi, force_pallas=True))
    assert outi.dtype == jnp.int32
    assert jnp.array_equal(outi, 2 * ai + bi)

    # 4) Ragged / tiny size -> plain-JAX fallback path.
    a3 = jax.random.normal(ka, (3, 5, 7, 11), dtype=jnp.float32)
    b3 = jax.random.normal(kb, (3, 5, 7, 11), dtype=jnp.float32)
    out3 = jax.block_until_ready(my_add(a3, b3))
    assert jnp.allclose(out3, 2.0 * a3 + b3, atol=1e-6, rtol=1e-6)

    print("KERNEL_OK")
</pallas_src>

<mosaic_0001>
module attributes {stable_mosaic.version = 11 : i64} {
  func.func @_my_add_kernel(%arg0: i32, %arg1: memref<2x1024xf32, #tpu.memory_space<vmem>>, %arg2: memref<2x1024xf32, #tpu.memory_space<vmem>>, %arg3: memref<2x1024xf32, #tpu.memory_space<vmem>>) attributes {dimension_semantics = [#tpu.dimension_semantics<parallel>], iteration_bounds = array<i64: 1>, scalar_prefetch = 0 : i64, scratch_operands = 0 : i64, tpu.core_type = #tpu.core_type<tc>, window_params = [{transform_indices = @transform_0, window_bounds = array<i64: 2, 1024>}, {transform_indices = @transform_1, window_bounds = array<i64: 2, 1024>}, {transform_indices = @transform_2, window_bounds = array<i64: 2, 1024>}]} {
    %c0 = arith.constant 0 : index
    %c0_0 = arith.constant 0 : index
    %0 = vector.load %arg1[%c0, %c0_0] : memref<2x1024xf32, #tpu.memory_space<vmem>>, vector<2x1024xf32>
    %1 = arith.addf %0, %0 : vector<2x1024xf32>
    %c0_1 = arith.constant 0 : index
    %c0_2 = arith.constant 0 : index
    %2 = vector.load %arg2[%c0_1, %c0_2] : memref<2x1024xf32, #tpu.memory_space<vmem>>, vector<2x1024xf32>
    %3 = arith.addf %1, %2 : vector<2x1024xf32>
    %c0_3 = arith.constant 0 : index
    %c0_4 = arith.constant 0 : index
    %4 = vector.load %arg3[%c0_3, %c0_4] : memref<2x1024xf32, #tpu.memory_space<vmem>>, vector<2x1024xf32>
    tpu.vector_store %arg3[%c0_3, %c0_4], %3 {strides = array<i32>} : memref<2x1024xf32, #tpu.memory_space<vmem>>, vector<2x1024xf32>,
    return
  }
  func.func @transform_0(%arg0: i32) -> (i32, i32) {
    %c0_i32 = arith.constant 0 : i32
    %c0_i32_0 = arith.constant 0 : i32
    return %arg0, %c0_i32 : i32, i32
  }
  func.func @transform_1(%arg0: i32) -> (i32, i32) {
    %c0_i32 = arith.constant 0 : i32
    %c0_i32_0 = arith.constant 0 : i32
    return %arg0, %c0_i32 : i32, i32
  }
  func.func @transform_2(%arg0: i32) -> (i32, i32) {
    %c0_i32 = arith.constant 0 : i32
    %c0_i32_0 = arith.constant 0 : i32
    return %arg0, %c0_i32 : i32, i32
  }
}

</mosaic_0001>

<llo_original>
// kernel: tpu_custom_call.1
$region0: #{tpu_custom_call.1}
  #allocation0 [shape = 'u32[]', space=smem, size = 0x4, offset = 0x4, fixed_abs, tag = 'smem constant byte address 0x4 - core index']
  #allocation1 [shape = 'u32[72,128]{1,0:T(1,128)}', space=vmem, size = 0x9000, scoped, tag = 'internal scratch']
  %s0 = inlined_call_operand.hbm [shape: f32[2,1024], index: 0, kind: input, shape index: {}]
  %s1 = inlined_call_operand.hbm [shape: f32[2,1024], index: 1, kind: input, shape index: {}]
  %s2 = inlined_call_operand.hbm [shape: f32[2,1024], index: 2, kind: output, shape index: {}]
  %s3 = sld [smem:[#allocation0]]
  $region26: #{tpu_custom_call.1} parent=0
    _
  %s5 = ssub.s32 1, %s3
  %s6 = scalar_select 0, %s5, %s3
  $region1: #{tpu_custom_call.1} parent=0
    #allocation2 [shape = 'u8[8192]{0}', space=vmem, size = 0x2000, scoped, tag = 'input window, operand 0, single buffered']
    #allocation3 [shape = 's32[1]{0}', space=sflag, size = 0x4, scoped, tag = 'scoped memory for tpu_custom_call.1']
    #allocation4 [shape = 's32[1]{0}', space=sflag, size = 0x4, scoped, tag = 'scoped memory for tpu_custom_call.1']
    #allocation5 [shape = 'u8[8192]{0}', space=vmem, size = 0x2000, scoped, tag = 'input window, operand 1, single buffered']
    #allocation6 [shape = 's32[1]{0}', space=sflag, size = 0x4, scoped, tag = 'scoped memory for tpu_custom_call.1']
    #allocation7 [shape = 'u8[8192]{0}', space=vmem, size = 0x2000, scoped, tag = 'output window, operand 0, single buffered']
    %7 = vsyncpa [#allocation3], 0
    %8 = vsyncpa [#allocation6], 0
    %9 = vsyncpa [#allocation4], 0
    // Predicated region
    $region2: #{tpu_custom_call.1} parent=1 // pred_check
      _
    $region3: #{tpu_custom_call.1} parent=1 // pred_check_branch
      %11 = sbr.rel (0) target = $region5
    $region4: #{tpu_custom_call.1} parent=1 // pred_region
      %13 = vsyncadd [#allocation3], 0
      %s15 = sshll.u32 %s0, 4
      %s16 = int_to_ptr.hbm [resolvable:$true] %s15
      %s17 = sshll.u32 [#allocation2], 4
      %s18 = int_to_ptr.vmem [resolvable:$true] %s17
      %20 = dma.hbm_to_vmem [thread:$0]  %s16, 256, %s18, [#allocation3]
    $region5: #{tpu_custom_call.1} parent=1 // pred_fallthru
      _
    // Predicated region
    $region6: #{tpu_custom_call.1} parent=1 // pred_check
      _
    $region7: #{tpu_custom_call.1} parent=1 // pred_check_branch
      %22 = sbr.rel (0) target = $region9
    $region8: #{tpu_custom_call.1} parent=1 // pred_region
      %24 = vsyncadd [#allocation6], 0
      %s26 = sshll.u32 %s1, 4
      %s27 = int_to_ptr.hbm [resolvable:$true] %s26
      %s28 = sshll.u32 [#allocation5], 4
      %s29 = int_to_ptr.vmem [resolvable:$true] %s28
      %31 = dma.hbm_to_vmem [thread:$0]  %s27, 256, %s29, [#allocation6]
    $region9: #{tpu_custom_call.1} parent=1 // pred_fallthru
      _
    // Predicated region
    $region10: #{tpu_custom_call.1} parent=1 // pred_check
      _
    $region11: #{tpu_custom_call.1} parent=1 // pred_check_branch
      %33 = sbr.rel (0) target = $region13
    $region12: #{tpu_custom_call.1} parent=1 // pred_region
      %35 = dma.done [#allocation3], 256
    $region13: #{tpu_custom_call.1} parent=1 // pred_fallthru
      _
    // Predicated region
    $region14: #{tpu_custom_call.1} parent=1 // pred_check
      _
    $region15: #{tpu_custom_call.1} parent=1 // pred_check_branch
      %37 = sbr.rel (0) target = $region17
    $region16: #{tpu_custom_call.1} parent=1 // pred_region
      %39 = dma.done [#allocation6], 256
    $region17: #{tpu_custom_call.1} parent=1 // pred_fallthru
      _
    %v40 = vld [vmem:[#allocation2] sm:$0xff]
    %v41 = vld [vmem:[#allocation2 + $0x8] sm:$0xff]
    %v42 = vadd.f32 %v40, %v40
    %v43 = vadd.f32 %v41, %v41
    %v44 = vld [vmem:[#allocation5] sm:$0xff]
    %v45 = vld [vmem:[#allocation5 + $0x8] sm:$0xff]
    %v46 = vadd.f32 %v42, %v44
    %v47 = vadd.f32 %v43, %v45
    %48 = vst [vmem:[#allocation7] sm:$0xff] %v46
    %49 = vst [vmem:[#allocation7 + $0x8] sm:$0xff] %v47
    // Predicated region
    $region18: #{tpu_custom_call.1} parent=1 // pred_check
      _
    $region19: #{tpu_custom_call.1} parent=1 // pred_check_branch
      %51 = sbr.rel (0) target = $region21
    $region20: #{tpu_custom_call.1} parent=1 // pred_region
      %53 = vsyncadd [#allocation4], 0
      %s55 = sshll.u32 [#allocation7], 4
      %s56 = int_to_ptr.vmem [resolvable:$true] %s55
      %s57 = sshll.u32 %s2, 4
      %s58 = int_to_ptr.hbm [resolvable:$true] %s57
      %60 = dma.vmem_to_hbm [thread:$0]  %s56, 256, %s58, [#allocation4]
    $region21: #{tpu_custom_call.1} parent=1 // pred_fallthru
      _
    // Predicated region
    $region22: #{tpu_custom_call.1} parent=1 // pred_check
      _
    $region23: #{tpu_custom_call.1} parent=1 // pred_check_branch
      %62 = sbr.rel (0) target = $region25
    $region24: #{tpu_custom_call.1} parent=1 // pred_region
      %64 = dma.done [#allocation4], 256
    $region25: #{tpu_custom_call.1} parent=1 // pred_fallthru
      _
    %65 = vsyncpa [#allocation3], 1
    %66 = vsyncpa [#allocation6], 1
    %67 = vsyncpa [#allocation4], 1

</llo_original>
